<compile_context>
chip_gen: v5e
topology: v5e:2x2
jax: 0.10.0
libtpu: 0.0.40
codegen_flags: <defaults>
</compile_context>

<pallas_src>
import functools

import jax
import jax.numpy as jnp
from jax.experimental import pallas as pl
from jax.experimental.pallas import tpu as pltpu


def _round_up(x, m):
    return ((x + m - 1) // m) * m


def _preferred_lane_tile():
    # v5e MXU is 4x128^2 -> 128-wide tiles; v6e/v7x are 2x256^2 -> 256.
    try:
        kind = jax.devices()[0].device_kind.lower()
    except Exception:
        return 256
    return 128 if ("v5 lite" in kind or "v5e" in kind) else 256


def _pick_tile(dim, preferred):
    # dim is already a multiple of 128; use `preferred` when it divides evenly.
    return preferred if dim % preferred == 0 else 128


def _choose_imgs_per_tile(batch, s_pad, n_tiles, cap=256):
    """Whole images per M tile so the fused avgpool stays per-image."""
    cands = [d for d in range(1, batch + 1)
             if batch % d == 0 and d * s_pad <= cap]
    if not cands:
        return 1
    # Prefer >= 2 total grid iterations (keeps both v7x TensorCores busy),
    # then the largest M tile (best MXU row utilization).
    return max(cands, key=lambda d: ((batch // d) * n_tiles >= 2, d * s_pad))


# ----------------------------------------------------------------------------
# Fused kernel: (patches @ weight) + bias + ReLU  -> att (bf16)
#               and per-image spatial mean        -> fc  (f32)
#
#   a_ref    : (tm, K_pad)        bf16   im2col patches, batch folded into M
#   w_ref    : (K_pad, tn)        bf16   reshaped conv weight (full K)
#   bias_ref : (1, tn)            f32
#   att_ref  : (tm, tn)           bf16
#   fc_ref   : (imgs_per_tile, 1, tn) f32
# ----------------------------------------------------------------------------
def _stem_kernel(a_ref, w_ref, bias_ref, att_ref, fc_ref, *,
                 imgs_per_tile, s_pad, s_valid):
    # Single full-K MXU dot (no K grid axis, no accumulator scratch).
    y = jnp.dot(a_ref[...], w_ref[...], preferred_element_type=jnp.float32)
    y = jnp.maximum(y + bias_ref[...], 0.0)                    # (tm, tn) f32

    att_ref[...] = y.astype(att_ref.dtype)                     # bf16 writeback

    # Fused AvgPool2d(7, stride=1) == mean over the valid spatial rows.
    # Zero-padded spatial rows contribute exactly relu(bias) each; correct the
    # per-image sums algebraically instead of masking (no iota/select).
    tn = y.shape[-1]
    seg = jnp.sum(y.reshape(imgs_per_tile, s_pad, tn), axis=1, keepdims=True)
    pad_corr = (s_pad - s_valid) * jnp.maximum(bias_ref[...], 0.0)   # (1, tn)
    fc_ref[...] = (seg - pad_corr) * (1.0 / s_valid)


def conv_stem_avgpool_pallas(a, w_mat, bias, *, batch, s_pad, s_valid):
    m_total, k_pad = a.shape
    _, n_pad = w_mat.shape

    tn = _pick_tile(n_pad, _preferred_lane_tile())
    n_tiles = n_pad // tn

    ipt = _choose_imgs_per_tile(batch, s_pad, n_tiles)
    tm = ipt * s_pad
    m_tiles = batch // ipt

    grid = (n_tiles, m_tiles)   # N outermost: weight tile reused across M steps

    cost = pl.CostEstimate(
        flops=2 * m_total * k_pad * n_pad,
        transcendentals=0,
        bytes_accessed=int(a.size * 2 + w_mat.size * 2 + bias.size * 4
                           + m_total * n_pad * 2        # att output (bf16)
                           + batch * n_pad * 4))        # fc output (f32)

    kernel = functools.partial(_stem_kernel, imgs_per_tile=ipt,
                               s_pad=s_pad, s_valid=s_valid)

    return pl.pallas_call(
        kernel,
        out_shape=(
            jax.ShapeDtypeStruct((m_total, n_pad), jnp.bfloat16),   # att
            jax.ShapeDtypeStruct((batch, 1, n_pad), jnp.float32),   # fc
        ),
        grid_spec=pltpu.PrefetchScalarGridSpec(
            num_scalar_prefetch=0,
            grid=grid,
            in_specs=[
                pl.BlockSpec((tm, k_pad), lambda j, i: (i, 0)),     # A, full K
                pl.BlockSpec((k_pad, tn), lambda j, i: (0, j)),     # W, reused over i
                pl.BlockSpec((1, tn), lambda j, i: (0, j)),         # bias
            ],
            out_specs=[
                pl.BlockSpec((tm, tn), lambda j, i: (i, j)),        # att
                pl.BlockSpec((ipt, 1, tn), lambda j, i: (i, 0, j)), # fc
            ],
        ),
        compiler_params=pltpu.CompilerParams(
            dimension_semantics=("parallel", "parallel"),
            vmem_limit_bytes=32 * 1024 * 1024,   # fits v7x's 64 MiB physical VMEM
        ),
        cost_estimate=cost,
    )(a, w_mat, bias)


# ----------------------------------------------------------------------------
# Model wrapper (mirrors Model.forward up to the undefined EncoderDecoder)
# ----------------------------------------------------------------------------
@functools.partial(jax.jit, static_argnames=("stride", "pad"))
def model_forward(images, conv_w, conv_b, *, stride=2, pad=1):
    """images: (B, C_in, H, W) NCHW f32; returns (fc_feats, att_feats)."""
    B, C_in, H, W = images.shape
    C_out, _, kh, kw = conv_w.shape
    K = C_in * kh * kw

    # --- patch extraction in ONE fused XLA op, channels-LAST out spec so the
    # kernel's lane-dense (B, S, K) layout needs no transpose pass.
    # Feature ordering along K is (c_in, kh, kw), matching conv_w.reshape(C_out, K).
    patches = jax.lax.conv_general_dilated_patches(
        images, (kh, kw), (stride, stride), ((pad, pad), (pad, pad)),
        dimension_numbers=("NCHW", "OIHW", "NHWC"))          # (B, H', W', K)
    out_h, out_w = patches.shape[1], patches.shape[2]
    S = out_h * out_w

    # TPU-friendly padding: spatial rows -> multiple of 16 (bf16 sublane pack),
    # K and C_out -> multiples of 128 (lane-dense, unmasked loads/stores).
    S_pad = _round_up(S, 16)
    K_pad = _round_up(K, 128)
    N_pad = _round_up(C_out, 128)

    # Cast first (halves the bytes the pad touches); XLA fuses convert+pad.
    patches = patches.astype(jnp.bfloat16).reshape(B, S, K)
    patches = jnp.pad(patches, ((0, 0), (0, S_pad - S), (0, K_pad - K)))
    a = patches.reshape(B * S_pad, K_pad)                     # batch folded into M

    w_mat = jnp.pad(conv_w.reshape(C_out, K).T.astype(jnp.bfloat16),
                    ((0, K_pad - K), (0, N_pad - C_out)))     # (K_pad, N_pad)
    bias = jnp.pad(conv_b.astype(jnp.float32).reshape(1, C_out),
                   ((0, 0), (0, N_pad - C_out)))              # (1, N_pad)

    att_pad, fc_pad = conv_stem_avgpool_pallas(
        a, w_mat, bias, batch=B, s_pad=S_pad, s_valid=S)

    # att_feats = patch_feats.reshape(B, C, -1).permute(0, 2, 1) -> (B, S, C)
    att_feats = att_pad.reshape(B, S_pad, N_pad)[:, :S, :C_out]      # bf16
    # fc_feats = AvgPool2d(7, 1)(patch_feats).squeeze().reshape(-1, C)
    fc_feats = fc_pad[:, 0, :C_out]                                   # f32

    # TODO(synk): output = self.encoder_decoder(att_feats, targets, mode=...)
    #             is undefined in the provided module; return its inputs.
    return fc_feats, att_feats


if __name__ == "__main__":
    key = jax.random.PRNGKey(0)
    k_img, k_w, k_b = jax.random.split(key, 3)

    # small stand-in shapes: batch=2, C_in=3, 14x14 images -> 7x7 x 32 features
    B, C_in, H, W = 2, 3, 14, 14
    C_feat, kh, kw = 32, 3, 3

    images = jax.random.normal(k_img, (B, C_in, H, W), dtype=jnp.float32)
    conv_w = 0.1 * jax.random.normal(k_w, (C_feat, C_in, kh, kw), dtype=jnp.float32)
    conv_b = 0.01 * jax.random.normal(k_b, (C_feat,), dtype=jnp.float32)

    fc_feats, att_feats = model_forward(images, conv_w, conv_b)
    jax.block_until_ready((fc_feats, att_feats))

    assert fc_feats.shape == (B, C_feat)
    assert att_feats.shape == (B, 7 * 7, C_feat)

    # Reference: plain-JAX conv (same bf16 inputs, f32 accumulate) + ReLU.
    ref = jax.lax.conv_general_dilated(
        images.astype(jnp.bfloat16), conv_w.astype(jnp.bfloat16),
        window_strides=(2, 2), padding=((1, 1), (1, 1)),
        dimension_numbers=("NCHW", "OIHW", "NCHW"),
        preferred_element_type=jnp.float32)
    ref = jnp.maximum(ref + conv_b[None, :, None, None], 0.0)   # (B, C, 7, 7)
    ref_att = ref.reshape(B, C_feat, -1).transpose(0, 2, 1)     # (B, 49, C)
    ref_fc = ref_att.mean(axis=1)

    assert jnp.allclose(att_feats.astype(jnp.float32), ref_att, atol=2e-2, rtol=2e-2)
    assert jnp.allclose(fc_feats, ref_fc, atol=2e-2, rtol=2e-2)
    # fused avgpool == spatial mean of (bf16) att_feats, up to bf16 rounding
    assert jnp.allclose(fc_feats, att_feats.astype(jnp.float32).mean(axis=1),
                        atol=1e-2, rtol=1e-2)

    print("KERNEL_OK")
</pallas_src>

<mosaic_0001>
module attributes {stable_mosaic.version = 11 : i64} {
  func.func @_stem_kernel(%arg0: i32, %arg1: i32, %arg2: memref<64x128xbf16, #tpu.memory_space<vmem>>, %arg3: memref<128x128xbf16, #tpu.memory_space<vmem>>, %arg4: memref<1x128xf32, #tpu.memory_space<vmem>>, %arg5: memref<64x128xbf16, #tpu.memory_space<vmem>>, %arg6: memref<1x1x128xf32, #tpu.memory_space<vmem>>) attributes {dimension_semantics = [#tpu.dimension_semantics<parallel>, #tpu.dimension_semantics<parallel>], iteration_bounds = array<i64: 1, 2>, scalar_prefetch = 0 : i64, scratch_operands = 0 : i64, tpu.core_type = #tpu.core_type<tc>, window_params = [{transform_indices = @transform_0, window_bounds = array<i64: 64, 128>}, {transform_indices = @transform_1, window_bounds = array<i64: 128, 128>}, {transform_indices = @transform_2, window_bounds = array<i64: 1, 128>}, {transform_indices = @transform_3, window_bounds = array<i64: 64, 128>}, {transform_indices = @transform_4, window_bounds = array<i64: 1, 1, 128>}]} {
    %c0 = arith.constant 0 : index
    %c0_0 = arith.constant 0 : index
    %0 = vector.load %arg2[%c0, %c0_0] : memref<64x128xbf16, #tpu.memory_space<vmem>>, vector<64x128xbf16>
    %c0_1 = arith.constant 0 : index
    %c0_2 = arith.constant 0 : index
    %1 = vector.load %arg3[%c0_1, %c0_2] : memref<128x128xbf16, #tpu.memory_space<vmem>>, vector<128x128xbf16>
    %cst = arith.constant dense<0.000000e+00> : vector<64x128xf32>
    %2 = tpu.matmul %0, %1, %cst {dimension_numbers = #tpu.dot_dimension_numbers<[1], [0], [0], [1], [0, 0, 1, 1], [], []>} : vector<64x128xbf16>, vector<128x128xbf16>, vector<64x128xf32> -> vector<64x128xf32>
    %c0_3 = arith.constant 0 : index
    %c0_4 = arith.constant 0 : index
    %3 = vector.load %arg4[%c0_3, %c0_4] : memref<1x128xf32, #tpu.memory_space<vmem>>, vector<1x128xf32>
    %4 = vector.broadcast %3 : vector<1x128xf32> to vector<64x128xf32>
    %5 = arith.addf %2, %4 : vector<64x128xf32>
    %cst_5 = arith.constant 0.000000e+00 : f32
    %6 = vector.broadcast %cst_5 : f32 to vector<64x128xf32>
    %7 = arith.maximumf %5, %6 : vector<64x128xf32>
    %8 = arith.truncf %7 : vector<64x128xf32> to vector<64x128xbf16>
    %c0_6 = arith.constant 0 : index
    %c0_7 = arith.constant 0 : index
    %9 = vector.load %arg5[%c0_6, %c0_7] : memref<64x128xbf16, #tpu.memory_space<vmem>>, vector<64x128xbf16>
    tpu.vector_store %arg5[%c0_6, %c0_7], %8 {strides = array<i32>} : memref<64x128xbf16, #tpu.memory_space<vmem>>, vector<64x128xbf16>,
    %10 = vector.shape_cast %7 : vector<64x128xf32> to vector<1x64x128xf32>
    %cst_8 = arith.constant dense<0.000000e+00> : vector<1x128xf32>
    %11 = vector.multi_reduction <add>, %10, %cst_8 [1] : vector<1x64x128xf32> to vector<1x128xf32>
    %12 = vector.shape_cast %11 : vector<1x128xf32> to vector<1x1x128xf32>
    %c0_9 = arith.constant 0 : index
    %c0_10 = arith.constant 0 : index
    %13 = vector.load %arg4[%c0_9, %c0_10] : memref<1x128xf32, #tpu.memory_space<vmem>>, vector<1x128xf32>
    %cst_11 = arith.constant 0.000000e+00 : f32
    %14 = vector.broadcast %cst_11 : f32 to vector<1x128xf32>
    %15 = arith.maximumf %13, %14 : vector<1x128xf32>
    %cst_12 = arith.constant 1.500000e+01 : f32
    %16 = vector.broadcast %cst_12 : f32 to vector<1x128xf32>
    %17 = arith.mulf %16, %15 : vector<1x128xf32>
    %18 = vector.shape_cast %17 : vector<1x128xf32> to vector<1x1x128xf32>
    %19 = arith.subf %12, %18 : vector<1x1x128xf32>
    %cst_13 = arith.constant 0.0204081628 : f32
    %20 = vector.broadcast %cst_13 : f32 to vector<1x1x128xf32>
    %21 = arith.mulf %19, %20 : vector<1x1x128xf32>
    %c0_14 = arith.constant 0 : index
    %c0_15 = arith.constant 0 : index
    %c0_16 = arith.constant 0 : index
    %22 = vector.load %arg6[%c0_14, %c0_15, %c0_16] : memref<1x1x128xf32, #tpu.memory_space<vmem>>, vector<1x1x128xf32>
    tpu.vector_store %arg6[%c0_14, %c0_15, %c0_16], %21 {strides = array<i32>} : memref<1x1x128xf32, #tpu.memory_space<vmem>>, vector<1x1x128xf32>,
    return
  }
  func.func @transform_0(%arg0: i32, %arg1: i32) -> (i32, i32) {
    %c0_i32 = arith.constant 0 : i32
    %c0_i32_0 = arith.constant 0 : i32
    return %arg1, %c0_i32 : i32, i32
  }
  func.func @transform_1(%arg0: i32, %arg1: i32) -> (i32, i32) {
    %c0_i32 = arith.constant 0 : i32
    %c0_i32_0 = arith.constant 0 : i32
    return %c0_i32, %arg0 : i32, i32
  }
  func.func @transform_2(%arg0: i32, %arg1: i32) -> (i32, i32) {
    %c0_i32 = arith.constant 0 : i32
    %c0_i32_0 = arith.constant 0 : i32
    return %c0_i32, %arg0 : i32, i32
  }
  func.func @transform_3(%arg0: i32, %arg1: i32) -> (i32, i32) {
    %c0_i32 = arith.constant 0 : i32
    return %arg1, %arg0 : i32, i32
  }
  func.func @transform_4(%arg0: i32, %arg1: i32) -> (i32, i32, i32) {
    %c0_i32 = arith.constant 0 : i32
    %c0_i32_0 = arith.constant 0 : i32
    return %arg1, %c0_i32, %arg0 : i32, i32, i32
  }
}

</mosaic_0001>

<llo_original>
// kernel: model_forward.1
$region0: #{model_forward.1}
  #allocation0 [shape = 'u32[]', space=smem, size = 0x4, offset = 0x4, fixed_abs, tag = 'smem constant byte address 0x4 - core index']
  #allocation1 [shape = 'u32[72,128]{1,0:T(1,128)}', space=vmem, size = 0x9000, scoped, tag = 'internal scratch']
  %s0 = inlined_call_operand.vmem [shape: bf16[128,128], index: 0, kind: input, shape index: {}]
  %s1 = inlined_call_operand.vmem [shape: bf16[128,128], index: 1, kind: input, shape index: {}]
  %s2 = inlined_call_operand.vmem [shape: f32[1,128], index: 2, kind: input, shape index: {}]
  %s3 = inlined_call_operand.vmem [shape: bf16[128,128], index: 3, kind: output, shape index: {0}]
  %s4 = inlined_call_operand.hbm [shape: f32[2,1,128], index: 4, kind: output, shape index: {1}]
  %5 = xla_tuple %s3, %s4
  %s6 = sld [smem:[#allocation0]]
  $region53: #{model_forward.1} parent=0
    _
  %s8 = ssub.s32 1, %s6
  %s9 = scalar_select 0, %s8, %s6
  $region1: #{model_forward.1} parent=0
    #allocation2 [shape = 'u8[1024]{0}', space=vmem, size = 0x400, scoped, tag = 'output window, operand 1']
    #allocation3 [shape = 's32[2]{0}', space=sflag, size = 0x8, scoped, tag = 'scoped memory for model_forward.1']
    %10 = vsyncpa [#allocation3], 0
    %s11 = scalar_lea.sflag [#allocation3], 1
    %12 = vsyncpa %s11, 0
    loop: start=0, step=1, limit=4
    $region2: #{model_forward.1} parent=1 // loop_pre_header
      _
    $region3: #{model_forward.1} parent=1 // loop_header
      %s14 = sphi 0, %s18
      %p15 = scmp.ge.s32.totalorder %s14, 4
      %s21 = sphi 0, %s33
      %s22 = sphi 0, %s29
      %s23 = sphi 0, %s21
      %s24 = sphi 0, %s22
      %s25 = sphi 0, %s23
      %s26 = sphi 0, %s24
      %s36 = sphi 0, %s38
      %s39 = sphi 0, %s36
      %s40 = sphi 0, %s39
      %s56 = sphi 0, %s40
      %s62 = sphi 0, %s64
      %s65 = sphi 0, %s62
      %s66 = sphi 0, %s65
      %s82 = sphi 0, %s66
      %s88 = sphi 0, %s90
      %s91 = sphi 0, %s88
      %s92 = sphi 0, %s91
      %s108 = sphi 0, %s92
      %s116 = sphi 0, %s118
      %s119 = sphi 0, %s116
      %s120 = sphi 0, %s119
      %s136 = sphi 0, %s120
      %s144 = sphi 0, %s146
      %s147 = sphi 0, %s144
      %s148 = sphi 0, %s147
      %s164 = sphi 0, %s148
    $region4: #{model_forward.1} parent=1 // loop_header_branch
      %17 = sbr.rel (%p15) target = $region8
    $region5: #{model_forward.1} parent=1 // loop_body
      %s19 = ssub.s32 %s14, 1
      %s20 = ssub.s32 %s14, 2
      %s27 = sadd.s32 1, %s22
      %p28 = scmp.ge.s32.totalorder %s27, 2
      %s29 = scalar_select %p28, 0, %s27
      %s30 = sadd.s32 1, %s21
      %s31 = scalar_select %p28, %s30, %s21
      %p32 = scmp.ge.s32.totalorder %s31, 1
      %s33 = scalar_select %p32, 0, %s31
      %s34 = ssub.s32 %s22, %s29
      %p35 = scmp.eq.s32.totalorder %s34, 0
      %s37 = sadd.s32 %s36, 1
      %s38 = scalar_select %p35, %s36, %s37
      %p41 = pneg %p35
      %p42 = scmp.eq.s32.totalorder %s14, 1
      %p43 = por %p41, %p42
      %p44 = scmp.ne.s32.totalorder %s36, %s39
      %p45 = scmp.eq.s32.totalorder %s14, 0
      %p46 = por %p44, %p45
      %p47 = scmp.ne.s32.totalorder %s36, %s39
      %p48 = scmp.eq.s32.totalorder %s19, 1
      %p49 = por %p47, %p48
      %p50 = scmp.ne.s32.totalorder %s39, %s40
      %p51 = scmp.eq.s32.totalorder %s19, 0
      %p52 = por %p50, %p51
      %p53 = scmp.ne.s32.totalorder %s39, %s40
      %p54 = scmp.eq.s32.totalorder %s20, 1
      %p55 = por %p53, %p54
      %p57 = scmp.ne.s32.totalorder %s40, %s56
      %p58 = scmp.eq.s32.totalorder %s20, 0
      %p59 = por %p57, %p58
      %s60 = ssub.s32 %s21, %s33
      %p61 = scmp.eq.s32.totalorder %s60, 0
      %s63 = sadd.s32 %s62, 1
      %s64 = scalar_select %p61, %s62, %s63
      %p67 = pneg %p61
      %p68 = scmp.eq.s32.totalorder %s14, 1
      %p69 = por %p67, %p68
      %p70 = scmp.ne.s32.totalorder %s62, %s65
      %p71 = scmp.eq.s32.totalorder %s14, 0
      %p72 = por %p70, %p71
      %p73 = scmp.ne.s32.totalorder %s62, %s65
      %p74 = scmp.eq.s32.totalorder %s19, 1
      %p75 = por %p73, %p74
      %p76 = scmp.ne.s32.totalorder %s65, %s66
      %p77 = scmp.eq.s32.totalorder %s19, 0
      %p78 = por %p76, %p77
      %p79 = scmp.ne.s32.totalorder %s65, %s66
      %p80 = scmp.eq.s32.totalorder %s20, 1
      %p81 = por %p79, %p80
      %p83 = scmp.ne.s32.totalorder %s66, %s82
      %p84 = scmp.eq.s32.totalorder %s20, 0
      %p85 = por %p83, %p84
      %s86 = ssub.s32 %s21, %s33
      %p87 = scmp.eq.s32.totalorder %s86, 0
      %s89 = sadd.s32 %s88, 1
      %s90 = scalar_select %p87, %s88, %s89
      %p93 = pneg %p87
      %p94 = scmp.eq.s32.totalorder %s14, 1
      %p95 = por %p93, %p94
      %p96 = scmp.ne.s32.totalorder %s88, %s91
      %p97 = scmp.eq.s32.totalorder %s14, 0
      %p98 = por %p96, %p97
      %p99 = scmp.ne.s32.totalorder %s88, %s91
      %p100 = scmp.eq.s32.totalorder %s19, 1
      %p101 = por %p99, %p100
      %p102 = scmp.ne.s32.totalorder %s91, %s92
      %p103 = scmp.eq.s32.totalorder %s19, 0
      %p104 = por %p102, %p103
      %p105 = scmp.ne.s32.totalorder %s91, %s92
      %p106 = scmp.eq.s32.totalorder %s20, 1
      %p107 = por %p105, %p106
      %p109 = scmp.ne.s32.totalorder %s92, %s108
      %p110 = scmp.eq.s32.totalorder %s20, 0
      %p111 = por %p109, %p110
      %s112 = ssub.s32 %s22, %s29
      %s113 = ssub.s32 %s21, %s33
      %s114 = sor.u32 %s112, %s113
      %p115 = scmp.eq.s32.totalorder %s114, 0
      %s117 = sadd.s32 %s116, 1
      %s118 = scalar_select %p115, %s116, %s117
      %p121 = pneg %p115
      %p122 = scmp.eq.s32.totalorder %s14, 1
      %p123 = por %p121, %p122
      %p124 = scmp.ne.s32.totalorder %s116, %s119
      %p125 = scmp.eq.s32.totalorder %s14, 0
      %p126 = por %p124, %p125
      %p127 = scmp.ne.s32.totalorder %s116, %s119
      %p128 = scmp.eq.s32.totalorder %s19, 1
      %p129 = por %p127, %p128
      %p130 = scmp.ne.s32.totalorder %s119, %s120
      %p131 = scmp.eq.s32.totalorder %s19, 0
      %p132 = por %p130, %p131
      %p133 = scmp.ne.s32.totalorder %s119, %s120
      %p134 = scmp.eq.s32.totalorder %s20, 1
      %p135 = por %p133, %p134
      %p137 = scmp.ne.s32.totalorder %s120, %s136
      %p138 = scmp.eq.s32.totalorder %s20, 0
      %p139 = por %p137, %p138
      %s140 = ssub.s32 %s22, %s29
      %s141 = ssub.s32 %s21, %s33
      %s142 = sor.u32 %s140, %s141
      %p143 = scmp.eq.s32.totalorder %s142, 0
      %s145 = sadd.s32 %s144, 1
      %s146 = scalar_select %p143, %s144, %s145
      %p149 = pneg %p143
      %p150 = scmp.eq.s32.totalorder %s14, 1
      %p151 = por %p149, %p150
      %p152 = scmp.ne.s32.totalorder %s144, %s147
      %p153 = scmp.eq.s32.totalorder %s14, 0
      %p154 = por %p152, %p153
      %p155 = scmp.ne.s32.totalorder %s144, %s147
      %p156 = scmp.eq.s32.totalorder %s19, 1
      %p157 = por %p155, %p156
      %p158 = scmp.ne.s32.totalorder %s147, %s148
      %p159 = scmp.eq.s32.totalorder %s19, 0
      %p160 = por %p158, %p159
      %p161 = scmp.ne.s32.totalorder %s147, %s148
      %p162 = scmp.eq.s32.totalorder %s20, 1
      %p163 = por %p161, %p162
      %p165 = scmp.ne.s32.totalorder %s148, %s164
      %p166 = scmp.eq.s32.totalorder %s20, 0
      %p167 = por %p165, %p166
      %p168 = scmp.le.s32.totalorder 1, %s14
      %p169 = scmp.lt.s32.totalorder %s14, 3
      %p170 = pnand %p168, %p169
      %p171 = pneg %p170
      // Predicated region
      $region9: #{model_forward.1} parent=5 // pred_check
        _
      $region10: #{model_forward.1} parent=5 // pred_check_branch
        %173 = sbr.rel (%p170) target = $region12
      $region11: #{model_forward.1} parent=5 // pred_region
        %s174 = ssub.s32 %s14, 1
        // Predicated region
        $region13: #{model_forward.1} parent=11 // pred_check
          %p175 = pneg %p78
        $region14: #{model_forward.1} parent=11 // pred_check_branch
          %177 = sbr.rel (%p175) target = $region16
        $region15: #{model_forward.1} parent=11 // pred_region
          %p178 = scmp.lt.s32.totalorder %s23, 0
          %s179 = scalar_select %p178, %s23, 0
          %s180 = smul.addr %s179, 4
          %s181 = scalar_lea.vmem %s1, %s180
        $region16: #{model_forward.1} parent=11 // pred_fallthru
          _
        // Predicated region
        $region17: #{model_forward.1} parent=11 // pred_check
          %p182 = pneg %p104
        $region18: #{model_forward.1} parent=11 // pred_check_branch
          %184 = sbr.rel (%p182) target = $region20
        $region19: #{model_forward.1} parent=11 // pred_region
          %p185 = scmp.lt.s32.totalorder %s23, 0
          %s186 = scalar_select %p185, %s23, 0
          %s187 = scalar_lea.vmem %s2, %s186
        $region20: #{model_forward.1} parent=11 // pred_fallthru
          _
      $region12: #{model_forward.1} parent=5 // pred_fallthru
        _
      %p188 = scmp.lt.s32.totalorder %s14, 2
      // Predicated region
      $region21: #{model_forward.1} parent=5 // pred_check
        %p189 = pneg %p188
      $region22: #{model_forward.1} parent=5 // pred_check_branch
        %191 = sbr.rel (%p189) target = $region24
      $region23: #{model_forward.1} parent=5 // pred_region
        // Predicated region
        $region25: #{model_forward.1} parent=23 // pred_check
          %p192 = pneg %p46
        $region26: #{model_forward.1} parent=23 // pred_check_branch
          %194 = sbr.rel (%p192) target = $region28
        $region27: #{model_forward.1} parent=23 // pred_region
          %s195 = smul.u32 8, %s22
          %p196 = scmp.lt.s32.totalorder %s195, 15
          %s197 = scalar_select %p196, %s195, 15
          %s198 = smul.addr %s197, 4
          %s199 = scalar_lea.vmem %s0, %s198
          %s200 = smul.u32 8, %s22
        $region28: #{model_forward.1} parent=23 // pred_fallthru
          _
      $region24: #{model_forward.1} parent=5 // pred_fallthru
        _
      %p201 = scmp.le.s32.totalorder 1, %s14
      %p202 = scmp.lt.s32.totalorder %s14, 3
      %p203 = pnand %p201, %p202
      %p204 = pneg %p203
      // Predicated region
      $region29: #{model_forward.1} parent=5 // pred_check
        _
      $region30: #{model_forward.1} parent=5 // pred_check_branch
        %206 = sbr.rel (%p203) target = $region32
      $region31: #{model_forward.1} parent=5 // pred_region
        %s207 = ssub.s32 %s14, 1
        %s208 = smul.u32 8, %s24
        %p209 = scmp.lt.s32.totalorder %s208, 15
        %s210 = scalar_select %p209, %s208, 15
        %s211 = smul.addr %s210, 4
        %s212 = scalar_lea.vmem %s0, %s211
        %p213 = pneg %p52
        %p214 = pneg %p49
        %p215 = scmp.lt.s32.totalorder %s23, 0
        %s216 = scalar_select %p215, %s23, 0
        %s217 = smul.addr %s216, 4
        %s218 = scalar_lea.vmem %s1, %s217
        %p219 = pneg %p78
        %p220 = pneg %p75
        %p221 = scmp.lt.s32.totalorder %s23, 0
        %s222 = scalar_select %p221, %s23, 0
        %s223 = scalar_lea.vmem %s2, %s222
        %p224 = pneg %p104
        %p225 = pneg %p101
        %p226 = pneg %p132
        %p227 = pneg %p129
        %s228 = smul.u32 8, %s24
        %p229 = scmp.lt.s32.totalorder %s228, 15
        %s230 = scalar_select %p229, %s228, 15
        %p231 = scmp.lt.s32.totalorder %s23, 0
        %s232 = scalar_select %p231, %s23, 0
        %s233 = sadd.s32 %s232, %s230
        %s234 = smul.addr %s233, 4
        %s235 = scalar_lea.vmem %s3, %s234
        %p236 = pneg %p160
        %p237 = pneg %p157
        %s238 = sand.u32 %s147, 1
        %s239 = scalar_lea.sflag [#allocation3], %s238
        %s240 = sand.u32 %s147, 1
        %s241 = scalar_lea.vmem [#allocation2], %s240
        %s242 = smul.u32 8, %s24
        %p243 = scmp.lt.s32.totalorder %s242, 15
        %s244 = scalar_select %p243, %s242, 15
        %s245 = smul.addr %s244, 4
        %s246 = scalar_lea.vmem %s0, %s245
        %s247 = smul.u32 8, %s24
        %p248 = scmp.lt.s32.totalorder %s23, 0
        %s249 = scalar_select %p248, %s23, 0
        %s250 = smul.addr %s249, 4
        %s251 = scalar_lea.vmem %s1, %s250
        %p252 = scmp.lt.s32.totalorder %s23, 0
        %s253 = scalar_select %p252, %s23, 0
        %s254 = scalar_lea.vmem %s2, %s253
        %s255 = smul.u32 8, %s24
        %p256 = scmp.lt.s32.totalorder %s255, 15
        %s257 = scalar_select %p256, %s255, 15
        %p258 = scmp.lt.s32.totalorder %s23, 0
        %s259 = scalar_select %p258, %s23, 0
        %s260 = sadd.s32 %s259, %s257
        %s261 = smul.addr %s260, 4
        %s262 = scalar_lea.vmem %s3, %s261
        %s263 = smul.u32 8, %s24
        %v264 = vld [vmem:[%s246] sm:$0xf]
        %v265 = vld [vmem:[%s246 + $0x4] sm:$0xf]
        %v266 = vld [vmem:[%s246 + $0x8] sm:$0xf]
        %v267 = vld [vmem:[%s246 + $0xc] sm:$0xf]
        %v268 = vld [vmem:[%s246 + $0x10] sm:$0xf]
        %v269 = vld [vmem:[%s246 + $0x14] sm:$0xf]
        %v270 = vld [vmem:[%s246 + $0x18] sm:$0xf]
        %v271 = vld [vmem:[%s246 + $0x1c] sm:$0xf]
        %v272 = vld [vmem:[%s251] sm:$0xf]
        %v273 = vld [vmem:[%s251 + $0x4] sm:$0xf]
        %v274 = vld [vmem:[%s251 + $0x8] sm:$0xf]
        %v275 = vld [vmem:[%s251 + $0xc] sm:$0xf]
        %v276 = vld [vmem:[%s251 + $0x10] sm:$0xf]
        %v277 = vld [vmem:[%s251 + $0x14] sm:$0xf]
        %v278 = vld [vmem:[%s251 + $0x18] sm:$0xf]
        %v279 = vld [vmem:[%s251 + $0x1c] sm:$0xf]
        %v280 = vld [vmem:[%s251 + $0x20] sm:$0xf]
        %v281 = vld [vmem:[%s251 + $0x24] sm:$0xf]
        %v282 = vld [vmem:[%s251 + $0x28] sm:$0xf]
        %v283 = vld [vmem:[%s251 + $0x2c] sm:$0xf]
        %v284 = vld [vmem:[%s251 + $0x30] sm:$0xf]
        %v285 = vld [vmem:[%s251 + $0x34] sm:$0xf]
        %v286 = vld [vmem:[%s251 + $0x38] sm:$0xf]
        %v287 = vld [vmem:[%s251 + $0x3c] sm:$0xf]
        %v288 = vld [vmem:[%s254] sm:$0x1]
        %v290 = vperm.slane %v288, 0
        %v300 = vunpack.c.l.b16 %v264
        %v301 = vunpack.c.l.b16 %v265
        %v302 = vunpack.c.l.b16 %v266
        %v303 = vunpack.c.l.b16 %v267
        %v304 = vunpack.c.l.b16 %v268
        %v305 = vunpack.c.l.b16 %v269
        %v306 = vunpack.c.l.b16 %v270
        %v307 = vunpack.c.l.b16 %v271
        %v308 = vpack.c.b16 %v301, %v300
        %v309 = vpack.c.b16 %v303, %v302
        %v310 = vpack.c.b16 %v305, %v304
        %v311 = vpack.c.b16 %v307, %v306
        %v332 = vunpack.c.l.b16 %v272
        %v333 = vunpack.c.l.b16 %v273
        %v334 = vunpack.c.l.b16 %v274
        %v335 = vunpack.c.l.b16 %v275
        %v336 = vunpack.c.l.b16 %v276
        %v337 = vunpack.c.l.b16 %v277
        %v338 = vunpack.c.l.b16 %v278
        %v339 = vunpack.c.l.b16 %v279
        %v340 = vunpack.c.l.b16 %v280
        %v341 = vunpack.c.l.b16 %v281
        %v342 = vunpack.c.l.b16 %v282
        %v343 = vunpack.c.l.b16 %v283
        %v344 = vunpack.c.l.b16 %v284
        %v345 = vunpack.c.l.b16 %v285
        %v346 = vunpack.c.l.b16 %v286
        %v347 = vunpack.c.l.b16 %v287
        %v348 = vpack.c.b16 %v333, %v332
        %v349 = vpack.c.b16 %v335, %v334
        %v350 = vpack.c.b16 %v337, %v336
        %v351 = vpack.c.b16 %v339, %v338
        %v352 = vpack.c.b16 %v341, %v340
        %v353 = vpack.c.b16 %v343, %v342
        %v354 = vpack.c.b16 %v345, %v344
        %v355 = vpack.c.b16 %v347, %v346
        %364 = vmatpush.bf16.msra.mxu0 %v355
        %365 = vmatpush.bf16.msra.mxu0 %v354
        %366 = vmatpush.bf16.msra.mxu0 %v353
        %367 = vmatpush.bf16.msra.mxu0 %v352
        %368 = vmatpush.bf16.msra.mxu0 %v351
        %369 = vmatpush.bf16.msra.mxu0 %v350
        %370 = vmatpush.bf16.msra.mxu0 %v349
        %371 = vmatpush.bf16.msra.mxu0 %v348
        %372 = vmatmul.bf16.gmra.mxu0 %v308
        %v373 = vpop.f32.mrf.mxu0
        %v374 = vadd.f32 %v290, %v373
        %v375 = vpop.f32.mrf.mxu0
        %v376 = vadd.f32 %v290, %v375
        %377 = vmatmul.bf16.gmra.mxu0 %v309
        %v378 = vpop.f32.mrf.mxu0
        %v379 = vadd.f32 %v290, %v378
        %v380 = vpop.f32.mrf.mxu0
        %v381 = vadd.f32 %v290, %v380
        %382 = vmatmul.bf16.gmra.mxu0 %v310
        %v383 = vpop.f32.mrf.mxu0
        %v384 = vadd.f32 %v290, %v383
        %v385 = vpop.f32.mrf.mxu0
        %v386 = vadd.f32 %v290, %v385
        %387 = vmatmul.bf16.gmra.mxu0 %v311
        %v388 = vpop.f32.mrf.mxu0
        %v389 = vadd.f32 %v290, %v388
        %v390 = vpop.f32.mrf.mxu0
        %v391 = vadd.f32 %v290, %v390
        %392 = vdwg.mxu0
        %v393 = vmax.f32 %v374, 0.0
        %v394 = vmax.f32 %v376, 0.0
        %v395 = vmax.f32 %v379, 0.0
        %v396 = vmax.f32 %v381, 0.0
        %v397 = vmax.f32 %v384, 0.0
        %v398 = vmax.f32 %v386, 0.0
        %v399 = vmax.f32 %v389, 0.0
        %v400 = vmax.f32 %v391, 0.0
        %v401 = vpack.c.bf16 %v393, %v393
        %v402 = vpack.c.bf16 %v394, %v394
        %v403 = vpack.c.bf16 %v395, %v395
        %v404 = vpack.c.bf16 %v396, %v396
        %v405 = vpack.c.bf16 %v397, %v397
        %v406 = vpack.c.bf16 %v398, %v398
        %v407 = vpack.c.bf16 %v399, %v399
        %v408 = vpack.c.bf16 %v400, %v400
        %409 = vst [vmem:[%s262] sm:$0xf] %v401
        %410 = vst [vmem:[%s262 + $0x4] sm:$0xf] %v402
        %411 = vst [vmem:[%s262 + $0x8] sm:$0xf] %v403
        %412 = vst [vmem:[%s262 + $0xc] sm:$0xf] %v404
        %413 = vst [vmem:[%s262 + $0x10] sm:$0xf] %v405
        %414 = vst [vmem:[%s262 + $0x14] sm:$0xf] %v406
        %415 = vst [vmem:[%s262 + $0x18] sm:$0xf] %v407
        %416 = vst [vmem:[%s262 + $0x1c] sm:$0xf] %v408
        %v417 = vadd.f32 %v393, %v394
        %v418 = vadd.f32 %v417, %v395
        %v419 = vadd.f32 %v418, %v396
        %v420 = vadd.f32 %v419, %v397
        %v421 = vadd.f32 %v420, %v398
        %v422 = vadd.f32 %v421, %v399
        %v423 = vadd.f32 %v422, %v400
        %v424 = vrot.slane %v423, 4
        %v425 = vadd.f32 %v423, %v424
        %v426 = vrot.slane %v425, 2
        %v427 = vadd.f32 %v425, %v426
        %v428 = vrot.slane %v427, 1
        %v429 = vadd.f32 %v427, %v428
        %v430 = vld [vmem:[%s254] sm:$0x1]
        %v431 = vmax.f32 %v430, 0.0
        %v432 = vmul.f32 %v431, 15.0
        %v433 = vsub.f32 %v429, %v432
        %v434 = vmul.f32 %v433, 0.020408163
        %435 = vst [vmem:[%s241] sm:$0x1] %v434
        %s436 = smul.u32 8, %s24
        %p437 = scmp.lt.s32.totalorder %s436, 15
        %s438 = scalar_select %p437, %s436, 15
        %p439 = scmp.lt.s32.totalorder %s23, 0
        %s440 = scalar_select %p439, %s23, 0
        %s441 = sadd.s32 %s440, %s438
        %s442 = smul.addr %s441, 4
        %s443 = scalar_lea.vmem %s3, %s442
        %s444 = sand.u32 %s147, 1
        %s445 = scalar_lea.sflag [#allocation3], %s444
        %s446 = sand.u32 %s147, 1
        %s447 = scalar_lea.vmem [#allocation2], %s446
        // Predicated region
        $region33: #{model_forward.1} parent=31 // pred_check
          %p448 = pneg %p129
        $region34: #{model_forward.1} parent=31 // pred_check_branch
          %450 = sbr.rel (%p448) target = $region36
        $region35: #{model_forward.1} parent=31 // pred_region
          %s451 = smul.u32 8, %s24
        $region36: #{model_forward.1} parent=31 // pred_fallthru
          _
        // Predicated region
        $region37: #{model_forward.1} parent=31 // pred_check
          %p452 = pneg %p157
        $region38: #{model_forward.1} parent=31 // pred_check_branch
          %454 = sbr.rel (%p452) target = $region40
        $region39: #{model_forward.1} parent=31 // pred_region
          %456 = vsyncadd %s445, 0
          %s457 = sadd.s32 %s23, %s24
          %s458 = scalar_lea.hbm %s4, %s457
          %s460 = sshll.u32 %s447, 4
          %s461 = int_to_ptr.vmem [resolvable:$true] %s460
          %s462 = sshll.u32 %s458, 4
          %s463 = int_to_ptr.hbm [resolvable:$true] %s462
          %465 = dma.vmem_to_hbm [thread:$0]  %s461, 16, %s463, %s445
        $region40: #{model_forward.1} parent=31 // pred_fallthru
          _
      $region32: #{model_forward.1} parent=5 // pred_fallthru
        _
      %p466 = scmp.le.s32.totalorder 2, %s14
      // Predicated region
      $region41: #{model_forward.1} parent=5 // pred_check
        %p467 = pneg %p466
      $region42: #{model_forward.1} parent=5 // pred_check_branch
        %469 = sbr.rel (%p467) target = $region44
      $region43: #{model_forward.1} parent=5 // pred_region
        %s470 = ssub.s32 %s14, 2
        // Predicated region
        $region45: #{model_forward.1} parent=43 // pred_check
          %p471 = pneg %p135
        $region46: #{model_forward.1} parent=43 // pred_check_branch
          %473 = sbr.rel (%p471) target = $region48
        $region47: #{model_forward.1} parent=43 // pred_region
          %s474 = smul.u32 8, %s26
          %p475 = scmp.lt.s32.totalorder %s474, 15
          %s476 = scalar_select %p475, %s474, 15
          %p477 = scmp.lt.s32.totalorder %s25, 0
          %s478 = scalar_select %p477, %s25, 0
          %s479 = sadd.s32 %s478, %s476
          %s480 = smul.addr %s479, 4
          %s481 = scalar_lea.vmem %s3, %s480
        $region48: #{model_forward.1} parent=43 // pred_fallthru
          _
        // Predicated region
        $region49: #{model_forward.1} parent=43 // pred_check
          %p482 = pneg %p163
        $region50: #{model_forward.1} parent=43 // pred_check_branch
          %484 = sbr.rel (%p482) target = $region52
        $region51: #{model_forward.1} parent=43 // pred_region
          %s485 = sand.u32 %s148, 1
          %s486 = scalar_lea.sflag [#allocation3], %s485
          %s487 = sand.u32 %s148, 1
          %s488 = scalar_lea.vmem [#allocation2], %s487
          %490 = dma.done %s486, 16
        $region52: #{model_forward.1} parent=43 // pred_fallthru
          _
      $region44: #{model_forward.1} parent=5 // pred_fallthru
        _
    $region6: #{model_forward.1} parent=1 // loop_footer
      %s18 = sadd.s32 1, %s14
    $region7: #{model_forward.1} parent=1 // loop_footer_branch
      %13 = sbr.rel target = $region3
    $region8: #{model_forward.1} parent=1 // loop_exit
      _
    %491 = vsyncpa [#allocation3], 1
    %s492 = scalar_lea.sflag [#allocation3], 1
    %493 = vsyncpa %s492, 1

</llo_original>
